<compile_context>
chip_gen: v7x
topology: tpu7x:2x2x1
jax: 0.10.0
libtpu: 0.0.40
codegen_flags: <defaults>
</compile_context>

<pallas_src>
import math

import jax
import jax.numpy as jnp
from jax import lax
from jax.experimental import pallas as pl
from jax.experimental.pallas import tpu as pltpu

_IRREGULAR_FUSED_N_MAX = 256   # irregular N above this is padded to a 128 multiple
_VMEM_LIMIT_CACHE = None


def _vmem_limit_bytes():
    """Per-chip scoped VMEM limit: ~half of physical (64 MiB on v5e/v6e, 32 MiB on v7x)."""
    global _VMEM_LIMIT_CACHE
    if _VMEM_LIMIT_CACHE is None:
        limit = 32 * 1024 * 1024
        try:
            cap = getattr(pltpu.get_tpu_info(), "vmem_capacity_bytes", None)
            if cap:
                limit = min(max(cap // 2, 32 * 1024 * 1024), 64 * 1024 * 1024)
        except Exception:
            pass
        _VMEM_LIMIT_CACHE = limit
    return _VMEM_LIMIT_CACHE


# ---------------------------------------------------------------------------
# Kernels
# ---------------------------------------------------------------------------
def _fused_kernel(adj_ref, x_ref, w_ref, o_ref):
    """Small-N path: Bblk graphs per step. out = Adj * sigmoid((x@W)(x@W)^T)."""
    bblk, n, in_f = x_ref.shape
    out_f = w_ref.shape[1]
    # One big MXU push for all Bblk*N rows (merge leading dims; lane dim unchanged).
    x2 = x_ref[...].reshape(bblk * n, in_f)
    t2 = jnp.dot(x2, w_ref[...], preferred_element_type=jnp.float32)
    t = t2.reshape(bblk, n, out_f)
    # Batched Gram: contracts out_f, no explicit transpose of t.
    s = jnp.einsum("bno,bmo->bnm", t, t, preferred_element_type=jnp.float32)
    o_ref[...] = (adj_ref[...].astype(jnp.float32) * jax.nn.sigmoid(s)).astype(o_ref.dtype)


def _tiled_kernel(adj_ref, x_ref, w_ref, o_ref, t_ref):
    """Tiled path: t = x@W computed once per batch element into VMEM scratch,
    then out_ij = Adj_ij * sigmoid(t_i . t_j^T) per (i, j) output tile."""
    i = pl.program_id(1)
    j = pl.program_id(2)

    @pl.when(jnp.logical_and(i == 0, j == 0))
    def _():
        t_ref[...] = jnp.dot(x_ref[...], w_ref[...], preferred_element_type=jnp.float32)

    ti, tj = o_ref.shape
    r0 = pl.multiple_of(i * ti, 128)
    c0 = pl.multiple_of(j * tj, 128)
    t_i = t_ref[pl.ds(r0, ti), :]
    t_j = t_ref[pl.ds(c0, tj), :]
    # Gram via dot_general contracting (1,1): no explicit transpose before the MXU.
    s = lax.dot_general(t_i, t_j,
                        dimension_numbers=(((1,), (1,)), ((), ())),
                        preferred_element_type=jnp.float32)
    o_ref[...] = (adj_ref[...].astype(jnp.float32) * jax.nn.sigmoid(s)).astype(o_ref.dtype)


# ---------------------------------------------------------------------------
# Tile / block pickers
# ---------------------------------------------------------------------------
def _pick_bblk(B, N):
    """Largest divisor of B such that Bblk*N rows <= 1024 and blocks stay small."""
    best = 1
    for c in range(1, B + 1):
        if B % c == 0 and c * N <= 1024 and c * N * N * 4 <= 4 * 1024 * 1024:
            best = c
    return best


def _pick_tiles(N, adj_bytes, out_bytes, vmem_limit):
    """Rectangular tiles (ti rows, tj lanes); tj as large as fits the VMEM budget."""
    ti = 128
    for c in (512, 256):
        if N % c == 0:
            ti = c
            break
    budget = vmem_limit // 2  # headroom for x, W, t scratch and pipeline state
    tj = 128
    for c in (2048, 1024, 512, 256, 128):
        if N % c == 0 and 2 * ti * c * (adj_bytes + out_bytes) <= budget:
            tj = c
            break
    return ti, tj


# ---------------------------------------------------------------------------
# pallas_call wrappers
# ---------------------------------------------------------------------------
def _fused_call(adj, x, w, out_dtype):
    B, N, _ = adj.shape
    in_f, out_f = w.shape
    bblk = _pick_bblk(B, N)
    return pl.pallas_call(
        _fused_kernel,
        out_shape=jax.ShapeDtypeStruct((B, N, N), out_dtype),
        grid=(B // bblk,),
        in_specs=[
            pl.BlockSpec((bblk, N, N), lambda g: (g, 0, 0)),
            pl.BlockSpec((bblk, N, in_f), lambda g: (g, 0, 0)),
            pl.BlockSpec((in_f, out_f), lambda g: (0, 0)),
        ],
        out_specs=pl.BlockSpec((bblk, N, N), lambda g: (g, 0, 0)),
        compiler_params=pltpu.CompilerParams(
            dimension_semantics=("parallel",),
            vmem_limit_bytes=_vmem_limit_bytes()),
    )(adj, x, w)


def _tiled_call(adj, x, w, out_dtype):
    B, N, _ = adj.shape
    in_f, out_f = w.shape
    vmem = _vmem_limit_bytes()
    ti, tj = _pick_tiles(N, jnp.dtype(adj.dtype).itemsize,
                         jnp.dtype(out_dtype).itemsize, vmem)
    return pl.pallas_call(
        _tiled_kernel,
        out_shape=jax.ShapeDtypeStruct((B, N, N), out_dtype),
        grid=(B, N // ti, N // tj),
        in_specs=[
            pl.BlockSpec((pl.Squeezed(), ti, tj), lambda b, i, j: (b, i, j)),
            # x stays VMEM-resident across the whole (i, j) sweep for each b
            # (block index unchanged -> no re-DMA).
            pl.BlockSpec((pl.Squeezed(), N, in_f), lambda b, i, j: (b, 0, 0)),
            pl.BlockSpec((in_f, out_f), lambda b, i, j: (0, 0)),
        ],
        out_specs=pl.BlockSpec((pl.Squeezed(), ti, tj), lambda b, i, j: (b, i, j)),
        scratch_shapes=[pltpu.VMEM((N, out_f), jnp.float32)],
        compiler_params=pltpu.CompilerParams(
            # b is the only megacore-sharded axis; i/j must be sequential so the
            # pl.when(i==0 & j==0) t-recompute guard stays valid.
            dimension_semantics=("parallel", "arbitrary", "arbitrary"),
            vmem_limit_bytes=vmem),
    )(adj, x, w)


# ---------------------------------------------------------------------------
# Public API
# ---------------------------------------------------------------------------
def relation_attention_batched(adj, inputdata, w, *, adj_is_binary_mask=False,
                               out_dtype=None):
    """adj: (B, N, N), inputdata: (B, N, in_f), w: (in_f, out_f) -> (B, N, N)."""
    B, N, _ = adj.shape
    in_f, out_f = w.shape
    assert inputdata.shape == (B, N, in_f)
    assert adj.shape == (B, N, N)

    if out_dtype is None:
        out_dtype = jnp.promote_types(adj.dtype,
                                      jnp.promote_types(inputdata.dtype, w.dtype))
        if not jnp.issubdtype(out_dtype, jnp.floating):
            out_dtype = jnp.float32

    # Compress the dominant HBM stream: a 0/1 adjacency mask is exact in bf16.
    if (adj_is_binary_mask and jnp.issubdtype(adj.dtype, jnp.floating)
            and jnp.dtype(adj.dtype).itemsize > 2):
        adj = adj.astype(jnp.bfloat16)

    if N % 128 == 0 and N > 128:
        return _tiled_call(adj, inputdata, w, out_dtype)

    if N > _IRREGULAR_FUSED_N_MAX:
        # Large irregular N: zero-pad to a multiple of 128 and use the tiled path.
        # Padded Adj rows/cols are zero -> padded outputs are zero -> slicing is exact.
        n_pad = ((N + 127) // 128) * 128
        adj_p = jnp.pad(adj, ((0, 0), (0, n_pad - N), (0, n_pad - N)))
        x_p = jnp.pad(inputdata, ((0, 0), (0, n_pad - N), (0, 0)))
        return _tiled_call(adj_p, x_p, w, out_dtype)[:, :N, :N]

    # Small N (possibly many relation heads): fused kernel, Bblk graphs per step.
    return _fused_call(adj, inputdata, w, out_dtype)


def relation_attention(adj, inputdata, w, **kwargs):
    """Single-graph forward matching the PyTorch module:
    adj: (N, N), inputdata: (N, in_features), w: (in_features, out_features)."""
    n, in_f = inputdata.shape
    assert w.shape[0] == in_f
    assert adj.shape == (n, n)
    return relation_attention_batched(adj[None], inputdata[None], w, **kwargs)[0]


# ---------------------------------------------------------------------------
# Reference & test
# ---------------------------------------------------------------------------
def _reference(adj, inputdata, w):
    t = jnp.einsum("...ni,io->...no", inputdata, w)
    s = jnp.einsum("...no,...mo->...nm", t, t)
    return adj * jax.nn.sigmoid(s)


if __name__ == "__main__":
    key = jax.random.PRNGKey(0)
    keys = jax.random.split(key, 12)

    # --- Case 1: shapes matching the module's forward (single graph, fused path) ---
    N, IN_F, OUT_F = 8, 32, 16
    bound = math.sqrt(6.0 / (IN_F + OUT_F))  # deterministic xavier_uniform_-style init
    W = jax.random.uniform(keys[0], (IN_F, OUT_F), jnp.float32, minval=-bound, maxval=bound)
    x = jax.random.normal(keys[1], (N, IN_F), jnp.float32)
    Adj = (jax.random.uniform(keys[2], (N, N), jnp.float32) > 0.5).astype(jnp.float32)

    out1 = relation_attention(Adj, x, W, adj_is_binary_mask=True)
    jax.block_until_ready(out1)
    ref1 = _reference(Adj, x, W)
    assert out1.shape == (N, N)
    assert jnp.allclose(out1, ref1, atol=2e-5, rtol=2e-5), "mismatch (single graph)"

    # --- Case 2: batched heads in one pallas_call (Bblk batch blocking) ---
    B = 4
    xb = jax.random.normal(keys[3], (B, N, IN_F), jnp.float32)
    Adjb = (jax.random.uniform(keys[4], (B, N, N), jnp.float32) > 0.5).astype(jnp.float32)
    out2 = relation_attention_batched(Adjb, xb, W, adj_is_binary_mask=True)
    jax.block_until_ready(out2)
    ref2 = _reference(Adjb, xb, W)
    assert out2.shape == (B, N, N)
    assert jnp.allclose(out2, ref2, atol=2e-5, rtol=2e-5), "mismatch (batched)"

    # --- Case 3: larger N exercising the single-call tiled path (VMEM-resident t) ---
    B2, N2, IN_F2, OUT_F2 = 2, 256, 64, 32
    bound2 = math.sqrt(6.0 / (IN_F2 + OUT_F2))
    W2 = jax.random.uniform(keys[5], (IN_F2, OUT_F2), jnp.float32, minval=-bound2, maxval=bound2)
    x2 = jax.random.normal(keys[6], (B2, N2, IN_F2), jnp.float32)
    Adj2 = (jax.random.uniform(keys[7], (B2, N2, N2), jnp.float32) > 0.5).astype(jnp.float32)
    out3 = relation_attention_batched(Adj2, x2, W2, adj_is_binary_mask=True)
    jax.block_until_ready(out3)
    ref3 = _reference(Adj2, x2, W2)
    assert out3.shape == (B2, N2, N2)
    assert jnp.allclose(out3, ref3, atol=2e-5, rtol=2e-5), "mismatch (tiled)"

    # --- Case 4: large irregular N -> zero-pad to a 128 multiple, tiled path, slice ---
    B3, N3, IN_F3, OUT_F3 = 2, 300, 32, 16
    bound3 = math.sqrt(6.0 / (IN_F3 + OUT_F3))
    W3 = jax.random.uniform(keys[8], (IN_F3, OUT_F3), jnp.float32, minval=-bound3, maxval=bound3)
    x3 = jax.random.normal(keys[9], (B3, N3, IN_F3), jnp.float32)
    Adj3 = (jax.random.uniform(keys[10], (B3, N3, N3), jnp.float32) > 0.5).astype(jnp.float32)
    out4 = relation_attention_batched(Adj3, x3, W3, adj_is_binary_mask=True)
    jax.block_until_ready(out4)
    ref4 = _reference(Adj3, x3, W3)
    assert out4.shape == (B3, N3, N3)
    assert jnp.allclose(out4, ref4, atol=2e-5, rtol=2e-5), "mismatch (padded)"

    print("KERNEL_OK")
</pallas_src>

<mosaic_0001>
module attributes {stable_mosaic.version = 11 : i64} {
  func.func @_fused_kernel(%arg0: i32, %arg1: memref<1x8x8xbf16, #tpu.memory_space<vmem>>, %arg2: memref<1x8x32xf32, #tpu.memory_space<vmem>>, %arg3: memref<32x16xf32, #tpu.memory_space<vmem>>, %arg4: memref<1x8x8xf32, #tpu.memory_space<vmem>>) attributes {dimension_semantics = [#tpu.dimension_semantics<parallel>], iteration_bounds = array<i64: 1>, scalar_prefetch = 0 : i64, scratch_operands = 0 : i64, tpu.core_type = #tpu.core_type<tc>, window_params = [{transform_indices = @transform_0, window_bounds = array<i64: 1, 8, 8>}, {transform_indices = @transform_1, window_bounds = array<i64: 1, 8, 32>}, {pipeline_mode = #tpu.pipeline_mode<synchronous>, transform_indices = @transform_2, window_bounds = array<i64: 32, 16>}, {transform_indices = @transform_3, window_bounds = array<i64: 1, 8, 8>}]} {
    %c0 = arith.constant 0 : index
    %c0_0 = arith.constant 0 : index
    %c0_1 = arith.constant 0 : index
    %0 = vector.load %arg2[%c0, %c0_0, %c0_1] : memref<1x8x32xf32, #tpu.memory_space<vmem>>, vector<1x8x32xf32>
    %1 = vector.shape_cast %0 : vector<1x8x32xf32> to vector<8x32xf32>
    %c0_2 = arith.constant 0 : index
    %c0_3 = arith.constant 0 : index
    %2 = vector.load %arg3[%c0_2, %c0_3] : memref<32x16xf32, #tpu.memory_space<vmem>>, vector<32x16xf32>
    %cst = arith.constant dense<0.000000e+00> : vector<8x16xf32>
    %3 = tpu.matmul %1, %2, %cst {dimension_numbers = #tpu.dot_dimension_numbers<[1], [0], [0], [1], [0, 0, 1, 1], [], []>} : vector<8x32xf32>, vector<32x16xf32>, vector<8x16xf32> -> vector<8x16xf32>
    %4 = vector.shape_cast %3 : vector<8x16xf32> to vector<1x8x16xf32>
    "tpu.trace_start"() <{level = 10 : i32, message = "bno,bmo->bnm"}> : () -> ()
    %cst_4 = arith.constant dense<0.000000e+00> : vector<1x8x8xf32>
    %5 = tpu.matmul %4, %4, %cst_4 {dimension_numbers = #tpu.dot_dimension_numbers<[2], [2], [1], [1], [0, 0, 0, 1, 1, 1], [0], [0]>} : vector<1x8x16xf32>, vector<1x8x16xf32>, vector<1x8x8xf32> -> vector<1x8x8xf32>
    "tpu.trace_stop"() : () -> ()
    %c0_5 = arith.constant 0 : index
    %c0_6 = arith.constant 0 : index
    %c0_7 = arith.constant 0 : index
    %6 = vector.load %arg1[%c0_5, %c0_6, %c0_7] : memref<1x8x8xbf16, #tpu.memory_space<vmem>>, vector<1x8x8xbf16>
    %7 = arith.extf %6 : vector<1x8x8xbf16> to vector<1x8x8xf32>
    %8 = arith.negf %5 : vector<1x8x8xf32>
    %9 = math.exp %8 : vector<1x8x8xf32>
    %cst_8 = arith.constant 1.000000e+00 : f32
    %10 = vector.broadcast %cst_8 : f32 to vector<1x8x8xf32>
    %11 = arith.addf %10, %9 : vector<1x8x8xf32>
    %12 = arith.divf %10, %11 : vector<1x8x8xf32>
    %13 = arith.mulf %7, %12 : vector<1x8x8xf32>
    %c0_9 = arith.constant 0 : index
    %c0_10 = arith.constant 0 : index
    %c0_11 = arith.constant 0 : index
    %14 = vector.load %arg4[%c0_9, %c0_10, %c0_11] : memref<1x8x8xf32, #tpu.memory_space<vmem>>, vector<1x8x8xf32>
    tpu.vector_store %arg4[%c0_9, %c0_10, %c0_11], %13 {strides = array<i32>} : memref<1x8x8xf32, #tpu.memory_space<vmem>>, vector<1x8x8xf32>,
    return
  }
  func.func @transform_0(%arg0: i32) -> (i32, i32, i32) {
    %c0_i32 = arith.constant 0 : i32
    %c0_i32_0 = arith.constant 0 : i32
    %c0_i32_1 = arith.constant 0 : i32
    return %arg0, %c0_i32, %c0_i32_0 : i32, i32, i32
  }
  func.func @transform_1(%arg0: i32) -> (i32, i32, i32) {
    %c0_i32 = arith.constant 0 : i32
    %c0_i32_0 = arith.constant 0 : i32
    %c0_i32_1 = arith.constant 0 : i32
    return %arg0, %c0_i32, %c0_i32_0 : i32, i32, i32
  }
  func.func @transform_2(%arg0: i32) -> (i32, i32) {
    %c0_i32 = arith.constant 0 : i32
    %c0_i32_0 = arith.constant 0 : i32
    %c0_i32_1 = arith.constant 0 : i32
    return %c0_i32, %c0_i32_0 : i32, i32
  }
  func.func @transform_3(%arg0: i32) -> (i32, i32, i32) {
    %c0_i32 = arith.constant 0 : i32
    %c0_i32_0 = arith.constant 0 : i32
    %c0_i32_1 = arith.constant 0 : i32
    return %arg0, %c0_i32, %c0_i32_0 : i32, i32, i32
  }
}

</mosaic_0001>

<llo_original>
// kernel: tpu_custom_call.1
$region0: #{tpu_custom_call.1}
  #allocation0 [shape = 'u32[]', space=smem, size = 0x4, offset = 0x4, fixed_abs, tag = 'smem constant byte address 0x4 - core index']
  #allocation1 [shape = 'u32[144,128]{1,0:T(1,128)}', space=vmem, size = 0x12000, scoped, tag = 'internal scratch']
  %s0 = inlined_call_operand.vmem [shape: bf16[1,8,8], index: 0, kind: input, shape index: {}]
  %s1 = inlined_call_operand.vmem [shape: f32[1,8,32], index: 1, kind: input, shape index: {}]
  %s2 = inlined_call_operand.vmem [shape: f32[32,16], index: 2, kind: input, shape index: {}]
  %s3 = inlined_call_operand.hbm [shape: f32[1,8,8], index: 3, kind: output, shape index: {}]
  %s4 = sld [smem:[#allocation0]]
  $region22: #{tpu_custom_call.1} parent=0
    _
  %s6 = ssub.s32 1, %s4
  %s7 = scalar_select 0, %s6, %s4
  $region1: #{tpu_custom_call.1} parent=0
    #allocation2 [shape = 'u8[4096]{0}', space=vmem, size = 0x1000, scoped, tag = 'output window, operand 0, single buffered']
    #allocation3 [shape = 's32[1]{0}', space=sflag, size = 0x4, scoped, tag = 'scoped memory for tpu_custom_call.1']
    %8 = vsyncpa [#allocation3], 0
    // Predicated region
    $region2: #{tpu_custom_call.1} parent=1 // pred_check
      _
    $region3: #{tpu_custom_call.1} parent=1 // pred_check_branch
      %10 = sbr.rel (0) target = $region5
    $region4: #{tpu_custom_call.1} parent=1 // pred_region
      _
    $region5: #{tpu_custom_call.1} parent=1 // pred_fallthru
      _
    // Predicated region
    $region6: #{tpu_custom_call.1} parent=1 // pred_check
      _
    $region7: #{tpu_custom_call.1} parent=1 // pred_check_branch
      %12 = sbr.rel (0) target = $region9
    $region8: #{tpu_custom_call.1} parent=1 // pred_region
      _
    $region9: #{tpu_custom_call.1} parent=1 // pred_fallthru
      _
    // Predicated region
    $region10: #{tpu_custom_call.1} parent=1 // pred_check
      _
    $region11: #{tpu_custom_call.1} parent=1 // pred_check_branch
      %14 = sbr.rel (0) target = $region13
    $region12: #{tpu_custom_call.1} parent=1 // pred_region
      _
    $region13: #{tpu_custom_call.1} parent=1 // pred_fallthru
      _
    %v15 = vld [vmem:[%s1] sm:$0xff]
    %v16 = vld [vmem:[%s2] sm:$0xff]
    %v17 = vld [vmem:[%s2 + $0x8] sm:$0xff]
    %v18 = vld [vmem:[%s2 + $0x10] sm:$0xff]
    %v19 = vld [vmem:[%s2 + $0x18] sm:$0xff]
    %vm20 = vcmask 261120
    %v22 = vsel %vm20, %v15, 0
    %24 = vmatprep.subr.mxu0 0.0
    %25 = vmatpush1.msra.mxu0 %v16
    %26 = vmatprep.subr.mxu0 0.0
    %27 = vmatpush1.msra.mxu0 %v17
    %28 = vmatprep.subr.mxu0 0.0
    %29 = vmatpush1.msra.mxu0 %v18
    %30 = vmatprep.subr.mxu0 0.0
    %31 = vmatpush1.msra.mxu0 %v19
    %32 = vmatprep.subr.mxu0 0.0
    %33 = vmatpush1.msra.mxu0 0.0
    %34 = vmatprep.subr.mxu0 0.0
    %35 = vmatpush1.msra.mxu0 0.0
    %36 = vmatprep.subr.mxu0 0.0
    %37 = vmatpush1.msra.mxu0 0.0
    %38 = vmatprep.subr.mxu0 0.0
    %39 = vmatpush1.msra.mxu0 0.0
    %40 = vmatprep.subr.mxu0 0.0
    %41 = vmatpush1.msra.mxu0 0.0
    %42 = vmatprep.subr.mxu0 0.0
    %43 = vmatpush1.msra.mxu0 0.0
    %44 = vmatprep.subr.mxu0 0.0
    %45 = vmatpush1.msra.mxu0 0.0
    %46 = vmatprep.subr.mxu0 0.0
    %47 = vmatpush1.msra.mxu0 0.0
    %48 = vmatprep.subr.mxu0 0.0
    %49 = vmatpush1.msra.mxu0 0.0
    %50 = vmatprep.subr.mxu0 0.0
    %51 = vmatpush1.msra.mxu0 0.0
    %52 = vmatprep.subr.mxu0 0.0
    %53 = vmatpush1.msra.mxu0 0.0
    %54 = vmatprep.subr.mxu0 0.0
    %55 = vmatpush1.msra.mxu0 0.0
    %56 = vmatprep.subr.mxu0 0.0
    %57 = vmatpush1.msra.mxu0 0.0
    %58 = vmatprep.subr.mxu0 0.0
    %59 = vmatpush1.msra.mxu0 0.0
    %60 = vmatprep.subr.mxu0 0.0
    %61 = vmatpush1.msra.mxu0 0.0
    %62 = vmatprep.subr.mxu0 0.0
    %63 = vmatpush1.msra.mxu0 0.0
    %64 = vmatprep.subr.mxu0 0.0
    %65 = vmatpush1.msra.mxu0 0.0
    %66 = vmatprep.subr.mxu0 0.0
    %67 = vmatpush1.msra.mxu0 0.0
    %68 = vmatprep.subr.mxu0 0.0
    %69 = vmatpush1.msra.mxu0 0.0
    %70 = vmatprep.subr.mxu0 0.0
    %71 = vmatpush1.msra.mxu0 0.0
    %72 = vmatprep.subr.mxu0 0.0
    %73 = vmatpush1.msra.mxu0 0.0
    %74 = vmatprep.subr.mxu0 0.0
    %75 = vmatpush1.msra.mxu0 0.0
    %76 = vmatprep.subr.mxu0 0.0
    %77 = vmatpush1.msra.mxu0 0.0
    %78 = vmatprep.subr.mxu0 0.0
    %79 = vmatpush1.msra.mxu0 0.0
    %80 = vmatprep.subr.mxu0 0.0
    %81 = vmatpush1.msra.mxu0 0.0
    %82 = vmatprep.subr.mxu0 0.0
    %83 = vmatpush1.msra.mxu0 0.0
    %84 = vmatprep.subr.mxu0 0.0
    %85 = vmatpush1.msra.mxu0 0.0
    %86 = vmatprep.subr.mxu0 0.0
    %87 = vmatpush1.msra.mxu0 0.0
    %88 = vmatprep.mubr.f32.mxu0 0.0
    %89 = vmatmul.mubr.f32.gmra.mrb[0].mxu0 %v22
    %v90 = vpop.f32.mrb[0].mxu0
    %v91 = vadd.f32 0.0, %v90
    %v92 = vpop.f32.mrb[0].mxu0
    %93 = vdwg.mxu0
    %vm94 = vcmask 130048
    %v96 = vsel %vm94, %v91, 0
    %98 = vmatprep.subr.mxu0 0.0
    %99 = vmatpush1.xpose.msra.mxu0 %v96
    %100 = vmatprep.subr.mxu0 0.0
    %101 = vmatpush1.xpose.msra.mxu0 0.0
    %102 = vmatprep.subr.mxu0 0.0
    %103 = vmatpush1.xpose.msra.mxu0 0.0
    %104 = vmatprep.subr.mxu0 0.0
    %105 = vmatpush1.xpose.msra.mxu0 0.0
    %106 = vmatprep.subr.mxu0 0.0
    %107 = vmatpush1.xpose.msra.mxu0 0.0
    %108 = vmatprep.subr.mxu0 0.0
    %109 = vmatpush1.xpose.msra.mxu0 0.0
    %110 = vmatprep.subr.mxu0 0.0
    %111 = vmatpush1.xpose.msra.mxu0 0.0
    %112 = vmatprep.subr.mxu0 0.0
    %113 = vmatpush1.xpose.msra.mxu0 0.0
    %114 = vmatprep.subr.mxu0 0.0
    %115 = vmatpush1.xpose.msra.mxu0 0.0
    %116 = vmatprep.subr.mxu0 0.0
    %117 = vmatpush1.xpose.msra.mxu0 0.0
    %118 = vmatprep.subr.mxu0 0.0
    %119 = vmatpush1.xpose.msra.mxu0 0.0
    %120 = vmatprep.subr.mxu0 0.0
    %121 = vmatpush1.xpose.msra.mxu0 0.0
    %122 = vmatprep.subr.mxu0 0.0
    %123 = vmatpush1.xpose.msra.mxu0 0.0
    %124 = vmatprep.subr.mxu0 0.0
    %125 = vmatpush1.xpose.msra.mxu0 0.0
    %126 = vmatprep.subr.mxu0 0.0
    %127 = vmatpush1.xpose.msra.mxu0 0.0
    %128 = vmatprep.subr.mxu0 0.0
    %129 = vmatpush1.xpose.msra.mxu0 0.0
    %130 = vmatprep.subr.mxu0 0.0
    %131 = vmatpush1.xpose.msra.mxu0 0.0
    %132 = vmatprep.subr.mxu0 0.0
    %133 = vmatpush1.xpose.msra.mxu0 0.0
    %134 = vmatprep.subr.mxu0 0.0
    %135 = vmatpush1.xpose.msra.mxu0 0.0
    %136 = vmatprep.subr.mxu0 0.0
    %137 = vmatpush1.xpose.msra.mxu0 0.0
    %138 = vmatprep.subr.mxu0 0.0
    %139 = vmatpush1.xpose.msra.mxu0 0.0
    %140 = vmatprep.subr.mxu0 0.0
    %141 = vmatpush1.xpose.msra.mxu0 0.0
    %142 = vmatprep.subr.mxu0 0.0
    %143 = vmatpush1.xpose.msra.mxu0 0.0
    %144 = vmatprep.subr.mxu0 0.0
    %145 = vmatpush1.xpose.msra.mxu0 0.0
    %146 = vmatprep.subr.mxu0 0.0
    %147 = vmatpush1.xpose.msra.mxu0 0.0
    %148 = vmatprep.subr.mxu0 0.0
    %149 = vmatpush1.xpose.msra.mxu0 0.0
    %150 = vmatprep.subr.mxu0 0.0
    %151 = vmatpush1.xpose.msra.mxu0 0.0
    %152 = vmatprep.subr.mxu0 0.0
    %153 = vmatpush1.xpose.msra.mxu0 0.0
    %154 = vmatprep.subr.mxu0 0.0
    %155 = vmatpush1.xpose.msra.mxu0 0.0
    %156 = vmatprep.subr.mxu0 0.0
    %157 = vmatpush1.xpose.msra.mxu0 0.0
    %158 = vmatprep.subr.mxu0 0.0
    %159 = vmatpush1.xpose.msra.mxu0 0.0
    %160 = vmatprep.subr.mxu0 0.0
    %161 = vmatpush1.xpose.msra.mxu0 0.0
    %162 = vmatprep.mubr.f32.mxu0 0.0
    %163 = vmatmul.mubr.f32.gmra.mrb[0].mxu0 %v96
    %v164 = vpop.f32.mrb[0].mxu0
    %v165 = vadd.f32 0.0, %v164
    %v166 = vpop.f32.mrb[0].mxu0
    %167 = vdwg.mxu0
    %v168 = vld [vmem:[%s0] sm:$0xf]
    %v169 = vunpack.c.l.bf16 %v168
    %v170 = vxor.u32 %v165, 2147483648
    %v171 = vmul.f32 %v170, 1.442695
    %v172 = vpow.pop %v171
    %v173 = vadd.f32 %v172, 1.0
    %v174 = vrcp.pop %v173
    %v175 = vmul.f32 1.0, %v174
    %v176 = vmul.f32 %v169, %v175
    %vm177 = vcmask 64512
    %178 = vst.msk [vmem:[#allocation2] sm:$0xff] %vm177, %v176
    // Predicated region
    $region14: #{tpu_custom_call.1} parent=1 // pred_check
      _
    $region15: #{tpu_custom_call.1} parent=1 // pred_check_branch
      %180 = sbr.rel (0) target = $region17
    $region16: #{tpu_custom_call.1} parent=1 // pred_region
      %s182 = ssub.s32 128, 128
      %183 = vsyncadd [#allocation3], %s182
      %s185 = sshll.u32 [#allocation2], 4
      %s186 = int_to_ptr.vmem [resolvable:$true] %s185
      %188 = dma.vmem_to_hbm [thread:$0]  %s186, 128, %s3, [#allocation3]
    $region17: #{tpu_custom_call.1} parent=1 // pred_fallthru
      _
    // Predicated region
    $region18: #{tpu_custom_call.1} parent=1 // pred_check
      _
    $region19: #{tpu_custom_call.1} parent=1 // pred_check_branch
      %190 = sbr.rel (0) target = $region21
    $region20: #{tpu_custom_call.1} parent=1 // pred_region
      %191 = dma.done [#allocation3], 128
    $region21: #{tpu_custom_call.1} parent=1 // pred_fallthru
      _
    %192 = vsyncpa [#allocation3], 1

</llo_original>
